<compile_context>
chip_gen: v7x
topology: tpu7x:2x2x1
jax: 0.10.0
libtpu: 0.0.40
codegen_flags: <defaults>
</compile_context>

<pallas_src>
import functools

import jax
import jax.numpy as jnp
from jax.experimental import pallas as pl
from jax.experimental.pallas import tpu as pltpu


# ---------------------------------------------------------------------------
# Kernel
# ---------------------------------------------------------------------------
def _modified_ln_kernel(x_ref, p_ref, o_ref, *, eps):
    """Masked LayerNorm over the last dim.

    p_ref packs the loop-invariant parameters as a (3, D) f32 block:
      row 0: mask / sum(mask)   (so sum(row 0) == 1)
      row 1: weight * mask
      row 2: bias * mask
    """
    x = x_ref[...].astype(jnp.float32)          # (TR, D)
    p = p_ref[...]                              # (3, D) f32
    mn = p[0:1, :]
    w = p[1:2, :]
    b = p[2:3, :]

    # Single-pass mean / variance (both reductions depend only on x).
    xm = x * mn
    mean = jnp.sum(xm, axis=-1, keepdims=True)        # (TR, 1)
    ex2 = jnp.sum(xm * x, axis=-1, keepdims=True)     # (TR, 1)
    var = ex2 - mean * mean
    out = (x - mean) * jax.lax.rsqrt(var + eps) * w + b
    o_ref[...] = out.astype(o_ref.dtype)


# ---------------------------------------------------------------------------
# Tiling helpers
# ---------------------------------------------------------------------------
def _vmem_capacity_bytes():
    try:
        info = pltpu.get_tpu_info()
        cap = getattr(info, "vmem_capacity_bytes", None)
        if cap:
            return int(cap)
    except Exception:
        pass
    return 64 * 1024 * 1024  # conservative default (v7x per-TC VMEM)


def _sublane_multiple(itemsize):
    # Packed sublanes: f32 -> 8 rows, bf16/f16 -> 16, int8/fp8 -> 32.
    return max(8, 32 // max(int(itemsize), 1))


def _auto_tile_rows(d, itemsize, n_rows):
    """Row tile sized so each grid step streams a multi-MiB block (this is a
    pure HBM-streaming op: the ~0.35 us per-step cost must be << per-step data
    time, worst on v7x's 3.2 TB/s HBM), while double-buffered I/O *plus* the
    in-kernel f32 temporaries stay well inside VMEM."""
    cap = _vmem_capacity_bytes()
    budget = int(cap * 0.8)                       # headroom for Mosaic scratch
    # Bytes per row: 2x double-buffered (in + out) blocks + ~3 live f32 tiles.
    per_row = 4 * d * itemsize + 12 * d
    tr_vmem = budget // max(per_row, 1)
    # Target ~4 MiB of input per grid step.
    tr_target = (4 * 1024 * 1024) // max(d * itemsize, 1)
    tr = max(1, min(tr_vmem, tr_target))
    mult = _sublane_multiple(itemsize)
    tr = max(mult, (tr // mult) * mult)
    rows_up = ((n_rows + mult - 1) // mult) * mult
    return int(min(tr, rows_up))


# ---------------------------------------------------------------------------
# Wrapper
# ---------------------------------------------------------------------------
def modified_ln_pallas(x, mask, weight, bias, current_subset_dim, eps=1e-6,
                       tile_rows=None):
    """Pallas version of ModifiedLN.forward.

    x: (..., current_subset_dim); mask/weight/bias: (embed_dim,).
    NOTE: like the PyTorch reference, an all-zero mask divides by zero.
    """
    d = int(current_subset_dim)
    assert x.shape[-1] == d
    orig_shape = x.shape
    out_dtype = x.dtype

    # ---- loop-invariant folding (done once, outside the kernel) ------------
    curr_mask = mask[:d].astype(jnp.float32)
    inv_c = 1.0 / jnp.sum(curr_mask)              # matches the reference
    params = jnp.stack(
        [curr_mask * inv_c,
         weight[:d].astype(jnp.float32) * curr_mask,
         bias[:d].astype(jnp.float32) * curr_mask], axis=0)          # (3, d)

    # ---- tiling: full-d blocks (no pad / slice passes), ragged row tail ----
    x2 = x.reshape(-1, d)
    n_rows = x2.shape[0]
    itemsize = jnp.dtype(out_dtype).itemsize
    if tile_rows is None:
        tile_rows = _auto_tile_rows(d, itemsize, n_rows)
    grid_steps = pl.cdiv(n_rows, tile_rows)

    # Explicit scoped-VMEM limit: >= what the pipeline + f32 temps need,
    # capped below physical so Mosaic keeps its own scratch headroom.
    cap = _vmem_capacity_bytes()
    in_block = tile_rows * d * itemsize
    needed = (4 * in_block                        # double-buffered in + out
              + 3 * tile_rows * d * 4             # live f32 temporaries
              + 2 * 3 * d * 4                     # (3, d) param buffers
              + (2 << 20))                        # internal scratch slack
    vmem_limit = int(max(32 << 20, min(needed, int(cap * 0.9))))

    kernel = functools.partial(_modified_ln_kernel, eps=float(eps))

    def build(semantics):
        return pl.pallas_call(
            kernel,
            out_shape=jax.ShapeDtypeStruct((n_rows, d), out_dtype),
            grid_spec=pltpu.PrefetchScalarGridSpec(
                num_scalar_prefetch=0,
                grid=(grid_steps,),
                in_specs=[
                    pl.BlockSpec((tile_rows, d), lambda i: (i, 0)),   # x rows
                    pl.BlockSpec((3, d), lambda i: (0, 0)),           # params
                ],
                out_specs=pl.BlockSpec((tile_rows, d), lambda i: (i, 0)),
            ),
            compiler_params=pltpu.CompilerParams(
                dimension_semantics=semantics,
                vmem_limit_bytes=vmem_limit),
        )

    # Prefer splitting the row grid across TensorCores (v7x has 2 TCs/chip);
    # fall back to plain "parallel" if CORE_PARALLEL is rejected.
    semantics_options = []
    core_parallel = getattr(pltpu, "CORE_PARALLEL", None)
    if core_parallel is not None and grid_steps >= 2:
        semantics_options.append((core_parallel,))
    semantics_options.append(("parallel",))

    out = None
    last_err = None
    for idx, sem in enumerate(semantics_options):
        try:
            out = build(sem)(x2, params)
            if idx + 1 < len(semantics_options):
                # Surface lowering/runtime errors now so the fallback can run.
                jax.block_until_ready(out)
            break
        except Exception as e:  # noqa: BLE001 - fall back to next semantics
            out = None
            last_err = e
    if out is None:
        raise last_err

    return out.reshape(orig_shape)


# ---------------------------------------------------------------------------
# Pure-JAX reference (mirrors the PyTorch forward)
# ---------------------------------------------------------------------------
def modified_ln_ref(x, mask, weight, bias, current_subset_dim, eps=1e-6):
    d = current_subset_dim
    curr_mask = mask[:d]
    sub_w = weight[:d]
    sub_b = bias[:d]
    weighted_sum = jnp.sum(x * curr_mask, axis=-1, keepdims=True)
    sum_c = jnp.sum(curr_mask)
    mean = weighted_sum / sum_c
    centered = x - mean
    weighted_sq_sum = jnp.sum((centered ** 2) * curr_mask, axis=-1, keepdims=True)
    var = weighted_sq_sum / sum_c
    normalized = centered / jnp.sqrt(var + eps)
    out = normalized * sub_w + sub_b
    return out * curr_mask


if __name__ == "__main__":
    # Module defaults: embed_dim=192, scale_factors=[1/4, 1/2, 1].
    embed_dim = 192
    scale_factors = [1 / 4, 1 / 2, 1]
    min_dim = int(embed_dim * scale_factors[0])   # 48 -> mask ones then zeros

    key = jax.random.PRNGKey(0)
    kw, kb, kx1, kx2, kx3 = jax.random.split(key, 5)

    # Module init uses zeros; random keeps the test non-trivial & deterministic.
    weight = jax.random.normal(kw, (embed_dim,), dtype=jnp.float32)
    bias = jax.random.normal(kb, (embed_dim,), dtype=jnp.float32)
    mask = jnp.concatenate(
        [jnp.ones((min_dim,), jnp.float32),
         jnp.zeros((embed_dim - min_dim,), jnp.float32)], axis=0)

    # Case 1: configure_subnetwork('m') -> d = 96 (non-multiple-of-128 lanes,
    # exercises masked loads/stores; no wrapper pad/slice passes anymore).
    d_m = int(embed_dim * scale_factors[1])       # 96
    x_m = jax.random.normal(kx1, (2, 8, d_m), dtype=jnp.float32)
    out_m = jax.block_until_ready(modified_ln_pallas(x_m, mask, weight, bias, d_m))
    ref_m = modified_ln_ref(x_m, mask, weight, bias, d_m)
    assert out_m.shape == x_m.shape
    assert jnp.allclose(out_m, ref_m, atol=1e-5, rtol=1e-5), "mismatch (d=96)"

    # Case 2: configure_subnetwork('s') -> d = 48 (ragged last row block:
    # 14 rows under one 16-row tile).
    d_s = int(embed_dim * scale_factors[0])       # 48
    x_s = jax.random.normal(kx2, (2, 7, d_s), dtype=jnp.float32)
    out_s = jax.block_until_ready(modified_ln_pallas(x_s, mask, weight, bias, d_s))
    ref_s = modified_ln_ref(x_s, mask, weight, bias, d_s)
    assert out_s.shape == x_s.shape
    assert jnp.allclose(out_s, ref_s, atol=1e-5, rtol=1e-5), "mismatch (d=48)"

    # Case 3: configure_subnetwork('l') -> d = 192; tile_rows override forces a
    # multi-step grid to exercise the pipelined / core-parallel path.
    d_l = int(embed_dim * scale_factors[2])       # 192
    x_l = jax.random.normal(kx3, (2, 4, 32, d_l), dtype=jnp.float32)
    out_l = jax.block_until_ready(
        modified_ln_pallas(x_l, mask, weight, bias, d_l, tile_rows=64))
    ref_l = modified_ln_ref(x_l, mask, weight, bias, d_l)
    assert out_l.shape == x_l.shape
    assert jnp.allclose(out_l, ref_l, atol=1e-5, rtol=1e-5), "mismatch (d=192)"

    print("KERNEL_OK")
</pallas_src>

<mosaic_0001>
module attributes {stable_mosaic.version = 11 : i64} {
  func.func @_modified_ln_kernel(%arg0: i32, %arg1: memref<16x96xf32, #tpu.memory_space<vmem>>, %arg2: memref<3x96xf32, #tpu.memory_space<vmem>>, %arg3: memref<16x96xf32, #tpu.memory_space<vmem>>) attributes {dimension_semantics = [#tpu.dimension_semantics<parallel>], iteration_bounds = array<i64: 1>, scalar_prefetch = 0 : i64, scratch_operands = 0 : i64, tpu.core_type = #tpu.core_type<tc>, window_params = [{transform_indices = @transform_0, window_bounds = array<i64: 16, 96>}, {pipeline_mode = #tpu.pipeline_mode<synchronous>, transform_indices = @transform_1, window_bounds = array<i64: 3, 96>}, {transform_indices = @transform_2, window_bounds = array<i64: 16, 96>}]} {
    %c0 = arith.constant 0 : index
    %c0_0 = arith.constant 0 : index
    %0 = vector.load %arg1[%c0, %c0_0] : memref<16x96xf32, #tpu.memory_space<vmem>>, vector<16x96xf32>
    %c0_1 = arith.constant 0 : index
    %c0_2 = arith.constant 0 : index
    %1 = vector.load %arg2[%c0_1, %c0_2] : memref<3x96xf32, #tpu.memory_space<vmem>>, vector<3x96xf32>
    %2 = vector.extract_strided_slice %1 {offsets = [0, 0], sizes = [1, 96], strides = [1, 1]} : vector<3x96xf32> to vector<1x96xf32>
    %3 = vector.extract_strided_slice %1 {offsets = [1, 0], sizes = [1, 96], strides = [1, 1]} : vector<3x96xf32> to vector<1x96xf32>
    %4 = vector.extract_strided_slice %1 {offsets = [2, 0], sizes = [1, 96], strides = [1, 1]} : vector<3x96xf32> to vector<1x96xf32>
    %5 = vector.broadcast %2 : vector<1x96xf32> to vector<16x96xf32>
    %6 = arith.mulf %0, %5 : vector<16x96xf32>
    %cst = arith.constant dense<0.000000e+00> : vector<16xf32>
    %7 = vector.multi_reduction <add>, %6, %cst [1] : vector<16x96xf32> to vector<16xf32>
    %8 = vector.shape_cast %7 : vector<16xf32> to vector<16x1xf32>
    %9 = arith.mulf %6, %0 : vector<16x96xf32>
    %cst_3 = arith.constant dense<0.000000e+00> : vector<16xf32>
    %10 = vector.multi_reduction <add>, %9, %cst_3 [1] : vector<16x96xf32> to vector<16xf32>
    %11 = vector.shape_cast %10 : vector<16xf32> to vector<16x1xf32>
    %12 = arith.mulf %8, %8 : vector<16x1xf32>
    %13 = arith.subf %11, %12 : vector<16x1xf32>
    %14 = vector.broadcast %8 : vector<16x1xf32> to vector<16x96xf32>
    %15 = arith.subf %0, %14 : vector<16x96xf32>
    %cst_4 = arith.constant 9.99999997E-7 : f32
    %16 = vector.broadcast %cst_4 : f32 to vector<16x1xf32>
    %17 = arith.addf %13, %16 : vector<16x1xf32>
    %18 = math.rsqrt %17 : vector<16x1xf32>
    %19 = vector.broadcast %18 : vector<16x1xf32> to vector<16x96xf32>
    %20 = arith.mulf %15, %19 : vector<16x96xf32>
    %21 = vector.broadcast %3 : vector<1x96xf32> to vector<16x96xf32>
    %22 = arith.mulf %20, %21 : vector<16x96xf32>
    %23 = vector.broadcast %4 : vector<1x96xf32> to vector<16x96xf32>
    %24 = arith.addf %22, %23 : vector<16x96xf32>
    %c0_5 = arith.constant 0 : index
    %c0_6 = arith.constant 0 : index
    %25 = vector.load %arg3[%c0_5, %c0_6] : memref<16x96xf32, #tpu.memory_space<vmem>>, vector<16x96xf32>
    tpu.vector_store %arg3[%c0_5, %c0_6], %24 {strides = array<i32>} : memref<16x96xf32, #tpu.memory_space<vmem>>, vector<16x96xf32>,
    return
  }
  func.func @transform_0(%arg0: i32) -> (i32, i32) {
    %c0_i32 = arith.constant 0 : i32
    %c0_i32_0 = arith.constant 0 : i32
    return %arg0, %c0_i32 : i32, i32
  }
  func.func @transform_1(%arg0: i32) -> (i32, i32) {
    %c0_i32 = arith.constant 0 : i32
    %c0_i32_0 = arith.constant 0 : i32
    %c0_i32_1 = arith.constant 0 : i32
    return %c0_i32, %c0_i32_0 : i32, i32
  }
  func.func @transform_2(%arg0: i32) -> (i32, i32) {
    %c0_i32 = arith.constant 0 : i32
    %c0_i32_0 = arith.constant 0 : i32
    return %arg0, %c0_i32 : i32, i32
  }
}

</mosaic_0001>

<llo_original>
// kernel: tpu_custom_call.1
$region0: #{tpu_custom_call.1}
  #allocation0 [shape = 'u32[]', space=smem, size = 0x4, offset = 0x4, fixed_abs, tag = 'smem constant byte address 0x4 - core index']
  #allocation1 [shape = 'u32[144,128]{1,0:T(1,128)}', space=vmem, size = 0x12000, scoped, tag = 'internal scratch']
  %s0 = inlined_call_operand.hbm [shape: f32[16,96], index: 0, kind: input, shape index: {}]
  %s1 = inlined_call_operand.hbm [shape: f32[3,96], index: 1, kind: input, shape index: {}]
  %s2 = inlined_call_operand.hbm [shape: f32[16,96], index: 2, kind: output, shape index: {}]
  %s3 = sld [smem:[#allocation0]]
  $region26: #{tpu_custom_call.1} parent=0
    _
  %s5 = ssub.s32 1, %s3
  %s6 = scalar_select 0, %s5, %s3
  $region1: #{tpu_custom_call.1} parent=0
    #allocation2 [shape = 'u8[8192]{0}', space=vmem, size = 0x2000, scoped, tag = 'input window, operand 0, single buffered']
    #allocation3 [shape = 's32[1]{0}', space=sflag, size = 0x4, scoped, tag = 'scoped memory for tpu_custom_call.1']
    #allocation4 [shape = 's32[1]{0}', space=sflag, size = 0x4, scoped, tag = 'scoped memory for tpu_custom_call.1']
    #allocation5 [shape = 'u8[2048]{0}', space=vmem, size = 0x800, scoped, tag = 'input window, operand 1, single buffered']
    #allocation6 [shape = 's32[1]{0}', space=sflag, size = 0x4, scoped, tag = 'scoped memory for tpu_custom_call.1']
    #allocation7 [shape = 'u8[8192]{0}', space=vmem, size = 0x2000, scoped, tag = 'output window, operand 0, single buffered']
    %7 = vsyncpa [#allocation3], 0
    %8 = vsyncpa [#allocation6], 0
    %9 = vsyncpa [#allocation4], 0
    // Predicated region
    $region2: #{tpu_custom_call.1} parent=1 // pred_check
      _
    $region3: #{tpu_custom_call.1} parent=1 // pred_check_branch
      %11 = sbr.rel (0) target = $region5
    $region4: #{tpu_custom_call.1} parent=1 // pred_region
      %s13 = ssub.s32 256, 256
      %14 = vsyncadd [#allocation3], %s13
      %s15 = sshll.u32 [#allocation2], 4
      %s16 = int_to_ptr.vmem [resolvable:$true] %s15
      %21 = dma.hbm_to_vmem [thread:$0]  %s0, 256, %s16, [#allocation3], 128, 128, 8
    $region5: #{tpu_custom_call.1} parent=1 // pred_fallthru
      _
    // Predicated region
    $region6: #{tpu_custom_call.1} parent=1 // pred_check
      _
    $region7: #{tpu_custom_call.1} parent=1 // pred_check_branch
      %23 = sbr.rel (0) target = $region9
    $region8: #{tpu_custom_call.1} parent=1 // pred_region
      %s25 = ssub.s32 64, 64
      %26 = vsyncadd [#allocation6], %s25
      %s28 = sshll.u32 [#allocation5], 4
      %s29 = int_to_ptr.vmem [resolvable:$true] %s28
      %31 = dma.hbm_to_vmem [thread:$0]  %s1, 64, %s29, [#allocation6]
    $region9: #{tpu_custom_call.1} parent=1 // pred_fallthru
      _
    // Predicated region
    $region10: #{tpu_custom_call.1} parent=1 // pred_check
      _
    $region11: #{tpu_custom_call.1} parent=1 // pred_check_branch
      %33 = sbr.rel (0) target = $region13
    $region12: #{tpu_custom_call.1} parent=1 // pred_region
      %34 = dma.done [#allocation3], 256
    $region13: #{tpu_custom_call.1} parent=1 // pred_fallthru
      _
    // Predicated region
    $region14: #{tpu_custom_call.1} parent=1 // pred_check
      _
    $region15: #{tpu_custom_call.1} parent=1 // pred_check_branch
      %36 = sbr.rel (0) target = $region17
    $region16: #{tpu_custom_call.1} parent=1 // pred_region
      %37 = dma.done [#allocation6], 64
    $region17: #{tpu_custom_call.1} parent=1 // pred_fallthru
      _
    %v38 = vld [vmem:[#allocation2] sm:$0xff]
    %v39 = vld [vmem:[#allocation2 + $0x8] sm:$0xff]
    %v40 = vld [vmem:[#allocation5] sm:$0x7]
    %v41 = vlaneseq
    %v42 = vshrl.u32 %v41, 7
    %v43 = vsub.s32 0, %v42
    %v44 = vrot.slane %v40, %v43
    %v45 = vmul.f32 %v38, %v44
    %v46 = vmul.f32 %v39, %v44
    %vm47 = vcmask 785408
    %v48 = vsel %vm47, %v45, 0.0
    %49 = vadd.xlane.f32.xlu0 %v48
    %v50 = vpop.xlane.xlu0 %49
    %v51 = vsel %vm47, %v46, 0.0
    %52 = vadd.xlane.f32.xlu0 %v51
    %v53 = vpop.xlane.xlu0 %52
    %v54 = vmul.f32 %v45, %v38
    %v55 = vmul.f32 %v46, %v39
    %v56 = vsel %vm47, %v54, 0.0
    %57 = vadd.xlane.f32.xlu0 %v56
    %v58 = vpop.xlane.xlu0 %57
    %v59 = vsel %vm47, %v55, 0.0
    %60 = vadd.xlane.f32.xlu0 %v59
    %v61 = vpop.xlane.xlu0 %60
    %v62 = vmul.f32 %v50, %v50
    %v63 = vmul.f32 %v53, %v53
    %v64 = vsub.f32 %v58, %v62
    %v65 = vsub.f32 %v61, %v63
    %v66 = vsub.f32 %v38, %v50
    %v67 = vsub.f32 %v39, %v53
    %v68 = vadd.f32 %v64, 1e-06
    %v69 = vadd.f32 %v65, 1e-06
    %v70 = vrsqrt.pop %v68
    %v71 = vrsqrt.pop %v69
    %v72 = vmul.f32 %v66, %v70
    %v73 = vmul.f32 %v67, %v71
    %v74 = vlaneseq
    %v75 = vshrl.u32 %v74, 7
    %v76 = vsub.s32 1, %v75
    %v77 = vrot.slane %v40, %v76
    %v78 = vmul.f32 %v72, %v77
    %v79 = vmul.f32 %v73, %v77
    %v80 = vlaneseq
    %v81 = vshrl.u32 %v80, 7
    %v82 = vsub.s32 2, %v81
    %v83 = vrot.slane %v40, %v82
    %v84 = vadd.f32 %v78, %v83
    %v85 = vadd.f32 %v79, %v83
    %86 = vst.msk [vmem:[#allocation7] sm:$0xff] %vm47, %v84
    %87 = vst.msk [vmem:[#allocation7 + $0x8] sm:$0xff] %vm47, %v85
    // Predicated region
    $region18: #{tpu_custom_call.1} parent=1 // pred_check
      _
    $region19: #{tpu_custom_call.1} parent=1 // pred_check_branch
      %89 = sbr.rel (0) target = $region21
    $region20: #{tpu_custom_call.1} parent=1 // pred_region
      %s91 = ssub.s32 256, 256
      %92 = vsyncadd [#allocation4], %s91
      %s93 = sshll.u32 [#allocation7], 4
      %s94 = int_to_ptr.vmem [resolvable:$true] %s93
      %99 = dma.vmem_to_hbm [thread:$0]  %s94, 256, %s2, [#allocation4], 128, 128, 8
    $region21: #{tpu_custom_call.1} parent=1 // pred_fallthru
      _
    // Predicated region
    $region22: #{tpu_custom_call.1} parent=1 // pred_check
      _
    $region23: #{tpu_custom_call.1} parent=1 // pred_check_branch
      %101 = sbr.rel (0) target = $region25
    $region24: #{tpu_custom_call.1} parent=1 // pred_region
      %102 = dma.done [#allocation4], 256
    $region25: #{tpu_custom_call.1} parent=1 // pred_fallthru
      _
    %103 = vsyncpa [#allocation3], 1
    %104 = vsyncpa [#allocation6], 1
    %105 = vsyncpa [#allocation4], 1

</llo_original>
